<compile_context>
chip_gen: v7x
topology: tpu7x:2x2x1
jax: 0.10.0
libtpu: 0.0.40
codegen_flags: <defaults>
</compile_context>

<pallas_src>
import jax
import jax.numpy as jnp
from jax.experimental import pallas as pl
from jax.experimental.pallas import tpu as pltpu


def _copy_kernel(x_ref, o_ref):
    # Identity copy of the current (block_rows, lanes) tile.
    o_ref[...] = x_ref[...]


_LANE_CANDIDATES = (8192, 4096, 2048, 1024, 512, 256, 128)
_MIN_GRID_STEPS = 4  # >= 2 * num_cores on v7x so both TensorCores participate


def _sublane_tile(dtype):
    """Packed sublane tile height for this dtype: (8,128) f32, (16,128) bf16,
    (32,128) int8/fp8."""
    itemsize = jnp.dtype(dtype).itemsize
    return {4: 8, 2: 16, 1: 32}.get(itemsize, 8)


def _chip_budgets():
    """(target_block_bytes, vmem_limit_bytes) per chip generation."""
    vmem = None
    try:
        vmem = pltpu.get_tpu_info().vmem_capacity_bytes
    except Exception:
        pass
    if vmem is not None and vmem >= 96 * 1024 * 1024:
        # v5e / v6e: 128 MiB physical VMEM -> bigger blocks, fewer grid steps.
        return 8 * 1024 * 1024, 64 * 1024 * 1024
    # v7x (64 MiB VMEM, 32 MiB scoped default) or unknown: stay conservative.
    # 4 MiB blocks -> 2 arrays x 2 buffers = 16 MiB resident, plenty of headroom.
    return 4 * 1024 * 1024, 32 * 1024 * 1024


def _pick_factorization(total, sublane):
    """Widest lane count (multiple of 128) dividing `total`, preferring a
    factorization whose row count is a multiple of the packed sublane tile."""
    for lanes in _LANE_CANDIDATES:          # lane-dense AND sublane-dense
        if total % lanes == 0 and (total // lanes) % sublane == 0:
            return lanes
    for lanes in _LANE_CANDIDATES:          # at least one packed tile of rows
        if total % lanes == 0 and (total // lanes) >= sublane:
            return lanes
    for lanes in _LANE_CANDIDATES:          # lane-aligned only (single block)
        if total % lanes == 0:
            return lanes
    return 0                                # not 128-aligned


def _pick_block_rows(rows, lanes, itemsize, sublane, target_block_bytes):
    """Block row count: multiple of the packed sublane tile, exact divisor of
    `rows` (no partial tail), close to the per-chip byte budget, and small
    enough to leave >= _MIN_GRID_STEPS grid steps for large tensors."""
    if rows <= sublane or rows % sublane != 0:
        return rows  # single full block; legal because it equals the array dim
    bytes_per_row = lanes * itemsize
    cand = max(sublane, target_block_bytes // bytes_per_row)
    if rows >= _MIN_GRID_STEPS * sublane:
        cand = min(cand, rows // _MIN_GRID_STEPS)
    cand = min(cand, rows)
    k = max(1, cand // sublane)
    while k > 1 and rows % (k * sublane) != 0:
        k -= 1
    return k * sublane


def reshape_pallas(x, shape, *, force_copy=False):
    """Equivalent of torch `x.view((x.size(0),) + shape)`.

    Default: metadata-only reshape (zero HBM traffic), exactly matching torch
    .view on a contiguous tensor.  With force_copy=True the flattened elements
    are streamed once through a Pallas identity-copy kernel in sublane/lane
    dense blocks (useful only when a materialized copy is explicitly needed).
    """
    b = x.shape[0]
    n = 1
    for d in x.shape[1:]:
        n *= d

    tgt = 1
    for d in shape:
        tgt *= d
    assert tgt == n, f"cannot view {x.shape} as {(b,) + tuple(shape)}"

    out_shape = (b,) + tuple(shape)

    if not force_copy:
        # A contiguous view is pure metadata: the zero-cost path on every chip.
        return jnp.reshape(x, out_shape)

    total = b * n
    sublane = _sublane_tile(x.dtype)
    lanes = _pick_factorization(total, sublane)
    if lanes == 0:
        # TODO(synk): if a copy is mandated for non-128-aligned totals, pad to
        # a 128 multiple and slice instead of loading the whole array at once.
        return jnp.reshape(x, out_shape)

    rows = total // lanes
    itemsize = jnp.dtype(x.dtype).itemsize
    target_block_bytes, vmem_limit_bytes = _chip_budgets()
    block_rows = _pick_block_rows(rows, lanes, itemsize, sublane,
                                  target_block_bytes)

    # Metadata-only reshape of the contiguous input to the 2-D streaming view.
    x2d = jnp.reshape(x, (rows, lanes))

    grid = (rows // block_rows,)  # block_rows divides rows: no partial tail

    out2d = pl.pallas_call(
        _copy_kernel,
        out_shape=jax.ShapeDtypeStruct((rows, lanes), x.dtype),
        grid=grid,
        in_specs=[pl.BlockSpec((block_rows, lanes), lambda i: (i, 0))],
        out_specs=pl.BlockSpec((block_rows, lanes), lambda i: (i, 0)),
        compiler_params=pltpu.CompilerParams(
            dimension_semantics=("parallel",),  # shards steps over v7x's 2 TCs
            vmem_limit_bytes=vmem_limit_bytes,
        ),
    )(x2d)

    return jnp.reshape(out2d, out_shape)


if __name__ == "__main__":
    key = jax.random.PRNGKey(0)

    # Small NCHW input consistent with the discriminator's usage.
    x = jax.random.normal(key, (2, 4, 16, 16), dtype=jnp.float32)
    target_shape = (4, 256)  # Reshape(4, 256): (2,4,16,16) -> (2,4,256)
    ref = x.reshape((x.shape[0],) + target_shape)

    # 1) Default (recommended) path: zero-cost metadata reshape.
    out = jax.block_until_ready(reshape_pallas(x, target_shape))
    assert out.shape == (2, 4, 256) and out.dtype == x.dtype
    assert bool(jnp.array_equal(out, ref))

    # 2) Explicit-copy path: exercises the Pallas streaming-copy kernel.
    out_copy = jax.block_until_ready(
        reshape_pallas(x, target_shape, force_copy=True))
    assert out_copy.shape == (2, 4, 256) and out_copy.dtype == x.dtype
    assert bool(jnp.array_equal(out_copy, ref))

    # 3) bf16 input through the copy path: checks dtype-aware sublane tiling.
    xb = jax.random.normal(key, (2, 8, 16, 16), dtype=jnp.bfloat16)
    outb = jax.block_until_ready(reshape_pallas(xb, (8, 256), force_copy=True))
    assert bool(jnp.array_equal(outb, xb.reshape(2, 8, 256)))

    # 4) Non-128-aligned total: metadata-only fallback even under force_copy.
    y = jax.random.normal(key, (2, 3, 5, 7), dtype=jnp.float32)
    out2 = jax.block_until_ready(reshape_pallas(y, (3, 35), force_copy=True))
    assert bool(jnp.array_equal(out2, y.reshape(2, 3, 35)))

    print("KERNEL_OK")
</pallas_src>

<mosaic_0001>
module attributes {stable_mosaic.version = 11 : i64} {
  func.func @_copy_kernel(%arg0: i32, %arg1: memref<8x256xf32, #tpu.memory_space<vmem>>, %arg2: memref<8x256xf32, #tpu.memory_space<vmem>>) attributes {dimension_semantics = [#tpu.dimension_semantics<parallel>], iteration_bounds = array<i64: 1>, scalar_prefetch = 0 : i64, scratch_operands = 0 : i64, tpu.core_type = #tpu.core_type<tc>, window_params = [{transform_indices = @transform_0, window_bounds = array<i64: 8, 256>}, {transform_indices = @transform_1, window_bounds = array<i64: 8, 256>}]} {
    %c0 = arith.constant 0 : index
    %c0_0 = arith.constant 0 : index
    %0 = vector.load %arg1[%c0, %c0_0] : memref<8x256xf32, #tpu.memory_space<vmem>>, vector<8x256xf32>
    %c0_1 = arith.constant 0 : index
    %c0_2 = arith.constant 0 : index
    %1 = vector.load %arg2[%c0_1, %c0_2] : memref<8x256xf32, #tpu.memory_space<vmem>>, vector<8x256xf32>
    tpu.vector_store %arg2[%c0_1, %c0_2], %0 {strides = array<i32>} : memref<8x256xf32, #tpu.memory_space<vmem>>, vector<8x256xf32>,
    return
  }
  func.func @transform_0(%arg0: i32) -> (i32, i32) {
    %c0_i32 = arith.constant 0 : i32
    %c0_i32_0 = arith.constant 0 : i32
    return %arg0, %c0_i32 : i32, i32
  }
  func.func @transform_1(%arg0: i32) -> (i32, i32) {
    %c0_i32 = arith.constant 0 : i32
    %c0_i32_0 = arith.constant 0 : i32
    return %arg0, %c0_i32 : i32, i32
  }
}

</mosaic_0001>

<llo_original>
// kernel: tpu_custom_call.1
$region0: #{tpu_custom_call.1}
  #allocation0 [shape = 'u32[]', space=smem, size = 0x4, offset = 0x4, fixed_abs, tag = 'smem constant byte address 0x4 - core index']
  #allocation1 [shape = 'u32[144,128]{1,0:T(1,128)}', space=vmem, size = 0x12000, scoped, tag = 'internal scratch']
  %s0 = inlined_call_operand.hbm [shape: f32[8,256], index: 0, kind: input, shape index: {}]
  %s1 = inlined_call_operand.hbm [shape: f32[8,256], index: 1, kind: output, shape index: {}]
  %s2 = sld [smem:[#allocation0]]
  $region18: #{tpu_custom_call.1} parent=0
    _
  %s4 = ssub.s32 1, %s2
  %s5 = scalar_select 0, %s4, %s2
  $region1: #{tpu_custom_call.1} parent=0
    #allocation2 [shape = 'u8[8192]{0}', space=vmem, size = 0x2000, scoped, tag = 'input window, operand 0, single buffered']
    #allocation3 [shape = 's32[1]{0}', space=sflag, size = 0x4, scoped, tag = 'scoped memory for tpu_custom_call.1']
    #allocation4 [shape = 's32[1]{0}', space=sflag, size = 0x4, scoped, tag = 'scoped memory for tpu_custom_call.1']
    #allocation5 [shape = 'u8[8192]{0}', space=vmem, size = 0x2000, scoped, tag = 'output window, operand 0, single buffered']
    %6 = vsyncpa [#allocation3], 0
    %7 = vsyncpa [#allocation4], 0
    // Predicated region
    $region2: #{tpu_custom_call.1} parent=1 // pred_check
      _
    $region3: #{tpu_custom_call.1} parent=1 // pred_check_branch
      %9 = sbr.rel (0) target = $region5
    $region4: #{tpu_custom_call.1} parent=1 // pred_region
      %s11 = ssub.s32 256, 256
      %12 = vsyncadd [#allocation3], %s11
      %s14 = sshll.u32 [#allocation2], 4
      %s15 = int_to_ptr.vmem [resolvable:$true] %s14
      %17 = dma.hbm_to_vmem [thread:$0]  %s0, 256, %s15, [#allocation3]
    $region5: #{tpu_custom_call.1} parent=1 // pred_fallthru
      _
    // Predicated region
    $region6: #{tpu_custom_call.1} parent=1 // pred_check
      _
    $region7: #{tpu_custom_call.1} parent=1 // pred_check_branch
      %19 = sbr.rel (0) target = $region9
    $region8: #{tpu_custom_call.1} parent=1 // pred_region
      %20 = dma.done [#allocation3], 256
    $region9: #{tpu_custom_call.1} parent=1 // pred_fallthru
      _
    %v21 = vld [vmem:[#allocation2] sm:$0xff]
    %v22 = vld [vmem:[#allocation2 + $0x8] sm:$0xff]
    %23 = vst [vmem:[#allocation5] sm:$0xff] %v21
    %24 = vst [vmem:[#allocation5 + $0x8] sm:$0xff] %v22
    // Predicated region
    $region10: #{tpu_custom_call.1} parent=1 // pred_check
      _
    $region11: #{tpu_custom_call.1} parent=1 // pred_check_branch
      %26 = sbr.rel (0) target = $region13
    $region12: #{tpu_custom_call.1} parent=1 // pred_region
      %s28 = ssub.s32 256, 256
      %29 = vsyncadd [#allocation4], %s28
      %s31 = sshll.u32 [#allocation5], 4
      %s32 = int_to_ptr.vmem [resolvable:$true] %s31
      %34 = dma.vmem_to_hbm [thread:$0]  %s32, 256, %s1, [#allocation4]
    $region13: #{tpu_custom_call.1} parent=1 // pred_fallthru
      _
    // Predicated region
    $region14: #{tpu_custom_call.1} parent=1 // pred_check
      _
    $region15: #{tpu_custom_call.1} parent=1 // pred_check_branch
      %36 = sbr.rel (0) target = $region17
    $region16: #{tpu_custom_call.1} parent=1 // pred_region
      %37 = dma.done [#allocation4], 256
    $region17: #{tpu_custom_call.1} parent=1 // pred_fallthru
      _
    %38 = vsyncpa [#allocation3], 1
    %39 = vsyncpa [#allocation4], 1

</llo_original>
